<compile_context>
chip_gen: v7x
topology: tpu7x:2x2x1
jax: 0.10.0
libtpu: 0.0.40
codegen_flags: <defaults>
</compile_context>

<pallas_src>
import math

import numpy as np
import jax
import jax.numpy as jnp
from jax.experimental import pallas as pl
from jax.experimental.pallas import tpu as pltpu


def find_multiple(n: int, k: int) -> int:
    if n % k == 0:
        return n
    return n + k - n % k


def _round_up(n: int, k: int) -> int:
    return ((n + k - 1) // k) * k


def _vmem_capacity_bytes() -> int:
    """Physical VMEM per TensorCore; 128 MiB fallback if query unavailable."""
    try:
        info = pltpu.get_tpu_info()
        cap = getattr(info, "vmem_capacity_bytes", None)
        if cap:
            return int(cap)
    except Exception:  # pragma: no cover - hardware-query fallback only
        pass
    return 128 << 20


def _buffered_supported() -> bool:
    """Narrow capability probe for BlockSpec(pipeline_mode=pl.Buffered(k))."""
    if not hasattr(pl, "Buffered"):
        return False
    try:
        pl.BlockSpec((8, 128), lambda i, j: (0, 0),
                     pipeline_mode=pl.Buffered(buffer_count=1))
        return True
    except (TypeError, ValueError):
        return False


_HAS_BUFFERED = _buffered_supported()


# ----------------------------------------------------------------------------
# Kernel
# ----------------------------------------------------------------------------
def mlp_kernel(x_ref, w12_ref, w3_ref, o_ref, acc_ref):
    """One (token-tile i, hidden-tile j) grid step of the SwiGLU MLP."""
    j = pl.program_id(1)
    th = w3_ref.shape[0]

    @pl.when(j == 0)
    def _init():
        acc_ref[...] = jnp.zeros_like(acc_ref)

    x = x_ref[...]                                           # (tm, D) bf16
    # Fused gate + up projection: one MXU pass -> (tm, 2*th) f32.
    h = jnp.dot(x, w12_ref[...], preferred_element_type=jnp.float32)
    h1 = h[:, :th]                                           # gate (lane-aligned)
    h2 = h[:, th:]                                           # up
    # SiLU in f32; single stable EUP transcendental per element.
    g = (h1 * jax.nn.sigmoid(h1)) * h2                       # (tm, th) f32
    acc_ref[...] += jnp.dot(g.astype(w3_ref.dtype), w3_ref[...],
                            preferred_element_type=jnp.float32)

    @pl.when(j == pl.num_programs(1) - 1)
    def _finalize():
        o_ref[...] = acc_ref[...].astype(o_ref.dtype)


# ----------------------------------------------------------------------------
# Planning / weight prep / wrapper
# ----------------------------------------------------------------------------
def _vmem_footprint(tm, th, D, cb, ob, weight_bufs):
    acts = 2 * tm * D * cb              # x tiles (double-buffered)
    outs = 2 * tm * D * ob              # output tiles
    w12 = weight_bufs * D * (2 * th) * cb
    w3 = weight_bufs * th * D * cb
    acc = tm * D * 4                    # f32 accumulator scratch
    inter = tm * (3 * th) * 4           # f32 intermediates h (2*th) + g (th)
    return acts + outs + w12 + w3 + acc + inter


def plan_mlp(M, D, H, *, compute_dtype=jnp.bfloat16, out_dtype=jnp.float32):
    """Pick tile sizes / buffering / VMEM limit for this chip generation."""
    cb = np.dtype(compute_dtype).itemsize
    ob = np.dtype(out_dtype).itemsize
    cap = _vmem_capacity_bytes()
    small_vmem = cap < (100 << 20)           # v7x-like: 64 MiB per TensorCore

    th_target = 512 if small_vmem else 1024  # halve weight tiles on v7x
    tm_target = 512                          # arithmetic-intensity lever

    # Hidden tile: multiple of 128 that divides H (H is a multiple of 256).
    th = H
    for cand in (th_target, 1024, 512, 256, 128):
        if cand <= H and H % cand == 0:
            th = cand
            break

    # Token tile: minimize padding waste; on 2-core chips keep >=2 tiles so
    # the "parallel" axis can be sharded across both TensorCores.
    min_tiles = 2 if (small_vmem and M >= 32) else 1
    n_tiles = max(min_tiles, math.ceil(M / tm_target))
    tm = max(16, _round_up(math.ceil(M / n_tiles), 16))

    n_h = H // th
    weight_bufs = 1 if n_h == 1 else 2
    grid_m = _round_up(M, tm) // tm
    # Deeper weight buffering for decode-ish shapes on big-VMEM chips only.
    if (not small_vmem) and n_h > 1 and grid_m == 1 and _HAS_BUFFERED:
        weight_bufs = 3

    budget = int(cap * 0.85)

    def footprint(tm_, th_, wb_):
        b = wb_ if _HAS_BUFFERED else 2      # no Buffered -> default 2 buffers
        return _vmem_footprint(tm_, th_, D, cb, ob, b)

    # Shrink until the (conservative) footprint fits this generation's VMEM.
    while footprint(tm, th, weight_bufs) > budget:
        if weight_bufs > 2:
            weight_bufs = 2
        elif th > 128:
            th //= 2
        elif tm > 64:
            tm = max(16, _round_up(tm // 2, 16))
        else:
            break

    n_h = H // th
    Mp = _round_up(M, tm)
    grid_m = Mp // tm
    if n_h == 1:
        weight_bufs = 1

    est = footprint(tm, th, max(weight_bufs, 2))
    vmem_limit = int(min(int(cap * 0.9),
                         max(32 << 20, int(est * 1.3) + (4 << 20))))

    return dict(tm=tm, th=th, Mp=Mp, n_h=n_h, grid_m=grid_m,
                weight_bufs=weight_bufs, vmem_limit=vmem_limit,
                compute_dtype=compute_dtype)


def prepare_mlp_weights(w1, w2, w3, *, th, compute_dtype=jnp.bfloat16):
    """One-time weight prep (hoist out of the forward path and cache).

    w1, w2: (D, H); w3: (H, D)  ->  w12: (n_h, D, 2*th), w3c: (H, D)
    """
    D, H = w1.shape
    n_h = H // th
    w12 = jnp.concatenate([w1.reshape(D, n_h, th),
                           w2.reshape(D, n_h, th)], axis=-1)        # (D,nH,2th)
    w12 = jnp.transpose(w12, (1, 0, 2)).astype(compute_dtype)       # (nH,D,2th)
    w3c = w3.astype(compute_dtype)                                  # (H, D)
    return w12, w3c


def _build_mlp_call(plan, D, H, out_dtype):
    tm, th, Mp = plan["tm"], plan["th"], plan["Mp"]
    n_h, grid_m = plan["n_h"], plan["grid_m"]
    cb = np.dtype(plan["compute_dtype"]).itemsize
    ob = np.dtype(out_dtype).itemsize

    def wspec(shape, index_map):
        wb = plan["weight_bufs"]
        if _HAS_BUFFERED and wb != 2:
            return pl.BlockSpec(shape, index_map,
                                pipeline_mode=pl.Buffered(buffer_count=wb))
        return pl.BlockSpec(shape, index_map)

    cost = pl.CostEstimate(
        flops=6 * Mp * D * H,                                  # 3 GEMMs
        transcendentals=Mp * H,                                # one sigmoid/elem
        bytes_accessed=Mp * D * (cb + ob) + 3 * D * H * cb * grid_m,
    )

    return pl.pallas_call(
        mlp_kernel,
        out_shape=jax.ShapeDtypeStruct((Mp, D), out_dtype),
        grid_spec=pltpu.PrefetchScalarGridSpec(
            num_scalar_prefetch=0,
            grid=(grid_m, n_h),
            in_specs=[
                pl.BlockSpec((tm, D), lambda i, j: (i, 0)),        # x tile
                wspec((None, D, 2 * th), lambda i, j: (j, 0, 0)),  # fused W1|W2
                wspec((th, D), lambda i, j: (j, 0)),               # W3 tile
            ],
            out_specs=pl.BlockSpec((tm, D), lambda i, j: (i, 0)),
            scratch_shapes=[pltpu.VMEM((tm, D), jnp.float32)],
        ),
        compiler_params=pltpu.CompilerParams(
            dimension_semantics=("parallel", "arbitrary"),
            vmem_limit_bytes=plan["vmem_limit"],
        ),
        cost_estimate=cost,
    )


def mlp_pallas_prepared(x, w12, w3c, plan):
    """x: [M, D]; w12: [n_h, D, 2*th]; w3c: [H, D] -> [M, D] (x.dtype)."""
    M, D = x.shape
    H = w3c.shape[0]
    Mp = plan["Mp"]
    xc = x.astype(plan["compute_dtype"])
    if Mp != M:
        xc = jnp.pad(xc, ((0, Mp - M), (0, 0)))
    out = _build_mlp_call(plan, D, H, x.dtype)(xc, w12, w3c)
    return out[:M] if Mp != M else out


def mlp_pallas(x, w1, w2, w3):
    """Convenience wrapper: plan tiles, prep weights once, run kernel."""
    M, D = x.shape
    H = w1.shape[1]
    assert w1.shape == (D, H) and w2.shape == (D, H) and w3.shape == (H, D)
    plan = plan_mlp(M, D, H, out_dtype=x.dtype)
    w12, w3c = prepare_mlp_weights(w1, w2, w3, th=plan["th"],
                                   compute_dtype=plan["compute_dtype"])
    return mlp_pallas_prepared(x, w12, w3c, plan)


if __name__ == "__main__":
    # Small LLaMA-ish config: n_embd=128 -> n_hidden=find_multiple(2*512/3,256)=512
    n_embd = 128
    n_hidden = find_multiple(int(2 * (4 * n_embd) / 3), 256)   # 512

    B, T = 2, 16
    M = B * T

    key = jax.random.PRNGKey(0)
    kx, k1, k2, k3 = jax.random.split(key, 4)

    x_btd = jax.random.normal(kx, (B, T, n_embd), dtype=jnp.float32)
    # Weights stored transposed vs. nn.Linear.weight: (in_features, out_features).
    w1 = jax.random.normal(k1, (n_embd, n_hidden), dtype=jnp.float32) * 0.02
    w2 = jax.random.normal(k2, (n_embd, n_hidden), dtype=jnp.float32) * 0.02
    w3 = jax.random.normal(k3, (n_hidden, n_embd), dtype=jnp.float32) * 0.02

    x = x_btd.reshape(M, n_embd)                  # flatten [B,T,D] -> [M,D]

    # One-time weight prep (hoisted out of the forward path), then the kernel.
    plan = plan_mlp(M, n_embd, n_hidden, out_dtype=x.dtype)
    w12, w3c = prepare_mlp_weights(w1, w2, w3, th=plan["th"])
    w12, w3c = jax.block_until_ready((w12, w3c))

    y = mlp_pallas_prepared(x, w12, w3c, plan)
    y = jax.block_until_ready(y)
    y_btd = y.reshape(B, T, n_embd)

    # Reference mirroring the kernel's bf16-in / f32-accumulate dtype flow.
    def mlp_ref(x, w1, w2, w3):
        f32 = jnp.float32
        xb = x.astype(jnp.bfloat16).astype(f32)
        w1b = w1.astype(jnp.bfloat16).astype(f32)
        w2b = w2.astype(jnp.bfloat16).astype(f32)
        w3b = w3.astype(jnp.bfloat16).astype(f32)
        h1 = xb @ w1b
        h2 = xb @ w2b
        g = (h1 * jax.nn.sigmoid(h1)) * h2
        g = g.astype(jnp.bfloat16).astype(f32)
        return g @ w3b

    y_ref = mlp_ref(x, w1, w2, w3).reshape(B, T, n_embd)
    assert jnp.allclose(y_btd, y_ref, atol=2e-3, rtol=2e-2), "mismatch vs reference"

    print("KERNEL_OK")
</pallas_src>

<mosaic_0001>
module attributes {stable_mosaic.version = 11 : i64} {
  func.func @mlp_kernel(%arg0: i32, %arg1: i32, %arg2: memref<32x128xbf16, #tpu.memory_space<vmem>>, %arg3: memref<1x128x1024xbf16, #tpu.memory_space<vmem>>, %arg4: memref<512x128xbf16, #tpu.memory_space<vmem>>, %arg5: memref<32x128xf32, #tpu.memory_space<vmem>>, %arg6: memref<32x128xf32, #tpu.memory_space<vmem>>) attributes {dimension_semantics = [#tpu.dimension_semantics<parallel>, #tpu.dimension_semantics<arbitrary>], iteration_bounds = array<i64: 1, 1>, scalar_prefetch = 0 : i64, scratch_operands = 1 : i64, tpu.core_type = #tpu.core_type<tc>, window_params = [{transform_indices = @transform_0, window_bounds = array<i64: 32, 128>}, {pipeline_mode = #tpu.pipeline_mode<synchronous>, transform_indices = @transform_1, window_bounds = array<i64: 1, 128, 1024>}, {pipeline_mode = #tpu.pipeline_mode<synchronous>, transform_indices = @transform_2, window_bounds = array<i64: 512, 128>}, {transform_indices = @transform_3, window_bounds = array<i64: 32, 128>}]} {
    %c0_i32 = arith.constant 0 : i32
    %0 = arith.cmpi eq, %arg1, %c0_i32 : i32
    %1 = arith.extui %0 : i1 to i32
    %c0_i32_0 = arith.constant 0 : i32
    %2 = arith.cmpi ne, %1, %c0_i32_0 : i32
    scf.if %2 {
      %cst_15 = arith.constant 0.000000e+00 : f32
      %25 = vector.broadcast %cst_15 : f32 to vector<32x128xf32>
      %c0_16 = arith.constant 0 : index
      %c0_17 = arith.constant 0 : index
      %26 = vector.load %arg6[%c0_16, %c0_17] : memref<32x128xf32, #tpu.memory_space<vmem>>, vector<32x128xf32>
      tpu.vector_store %arg6[%c0_16, %c0_17], %25 {strides = array<i32>} : memref<32x128xf32, #tpu.memory_space<vmem>>, vector<32x128xf32>,
    } else {
    }
    %c0 = arith.constant 0 : index
    %c0_1 = arith.constant 0 : index
    %3 = vector.load %arg2[%c0, %c0_1] : memref<32x128xbf16, #tpu.memory_space<vmem>>, vector<32x128xbf16>
    %c0_2 = arith.constant 0 : index
    %c0_3 = arith.constant 0 : index
    %c0_4 = arith.constant 0 : index
    %4 = vector.load %arg3[%c0_2, %c0_3, %c0_4] : memref<1x128x1024xbf16, #tpu.memory_space<vmem>>, vector<1x128x1024xbf16>
    %5 = vector.shape_cast %4 : vector<1x128x1024xbf16> to vector<128x1024xbf16>
    %cst = arith.constant dense<0.000000e+00> : vector<32x1024xf32>
    %6 = tpu.matmul %3, %5, %cst {dimension_numbers = #tpu.dot_dimension_numbers<[1], [0], [0], [1], [0, 0, 1, 1], [], []>} : vector<32x128xbf16>, vector<128x1024xbf16>, vector<32x1024xf32> -> vector<32x1024xf32>
    %7 = vector.extract_strided_slice %6 {offsets = [0, 0], sizes = [32, 512], strides = [1, 1]} : vector<32x1024xf32> to vector<32x512xf32>
    %8 = vector.extract_strided_slice %6 {offsets = [0, 512], sizes = [32, 512], strides = [1, 1]} : vector<32x1024xf32> to vector<32x512xf32>
    %9 = arith.negf %7 : vector<32x512xf32>
    %10 = math.exp %9 : vector<32x512xf32>
    %cst_5 = arith.constant 1.000000e+00 : f32
    %11 = vector.broadcast %cst_5 : f32 to vector<32x512xf32>
    %12 = arith.addf %11, %10 : vector<32x512xf32>
    %13 = arith.divf %11, %12 : vector<32x512xf32>
    %14 = arith.mulf %7, %13 : vector<32x512xf32>
    %15 = arith.mulf %14, %8 : vector<32x512xf32>
    %c0_6 = arith.constant 0 : index
    %c0_7 = arith.constant 0 : index
    %16 = vector.load %arg6[%c0_6, %c0_7] : memref<32x128xf32, #tpu.memory_space<vmem>>, vector<32x128xf32>
    %17 = arith.truncf %15 : vector<32x512xf32> to vector<32x512xbf16>
    %c0_8 = arith.constant 0 : index
    %c0_9 = arith.constant 0 : index
    %18 = vector.load %arg4[%c0_8, %c0_9] : memref<512x128xbf16, #tpu.memory_space<vmem>>, vector<512x128xbf16>
    %cst_10 = arith.constant dense<0.000000e+00> : vector<32x128xf32>
    %19 = tpu.matmul %17, %18, %cst_10 {dimension_numbers = #tpu.dot_dimension_numbers<[1], [0], [0], [1], [0, 0, 1, 1], [], []>} : vector<32x512xbf16>, vector<512x128xbf16>, vector<32x128xf32> -> vector<32x128xf32>
    %20 = arith.addf %16, %19 : vector<32x128xf32>
    %c0_11 = arith.constant 0 : index
    %c0_12 = arith.constant 0 : index
    %21 = vector.load %arg6[%c0_11, %c0_12] : memref<32x128xf32, #tpu.memory_space<vmem>>, vector<32x128xf32>
    tpu.vector_store %arg6[%c0_11, %c0_12], %20 {strides = array<i32>} : memref<32x128xf32, #tpu.memory_space<vmem>>, vector<32x128xf32>,
    %c0_i32_13 = arith.constant 0 : i32
    %22 = arith.cmpi eq, %arg1, %c0_i32_13 : i32
    %23 = arith.extui %22 : i1 to i32
    %c0_i32_14 = arith.constant 0 : i32
    %24 = arith.cmpi ne, %23, %c0_i32_14 : i32
    scf.if %24 {
      %c0_15 = arith.constant 0 : index
      %c0_16 = arith.constant 0 : index
      %25 = vector.load %arg6[%c0_15, %c0_16] : memref<32x128xf32, #tpu.memory_space<vmem>>, vector<32x128xf32>
      %c0_17 = arith.constant 0 : index
      %c0_18 = arith.constant 0 : index
      %26 = vector.load %arg5[%c0_17, %c0_18] : memref<32x128xf32, #tpu.memory_space<vmem>>, vector<32x128xf32>
      tpu.vector_store %arg5[%c0_17, %c0_18], %25 {strides = array<i32>} : memref<32x128xf32, #tpu.memory_space<vmem>>, vector<32x128xf32>,
    } else {
    }
    return
  }
  func.func @transform_0(%arg0: i32, %arg1: i32) -> (i32, i32) {
    %c0_i32 = arith.constant 0 : i32
    %c0_i32_0 = arith.constant 0 : i32
    return %arg0, %c0_i32 : i32, i32
  }
  func.func @transform_1(%arg0: i32, %arg1: i32) -> (i32, i32, i32) {
    %c0_i32 = arith.constant 0 : i32
    %c0_i32_0 = arith.constant 0 : i32
    %c0_i32_1 = arith.constant 0 : i32
    return %arg1, %c0_i32, %c0_i32_0 : i32, i32, i32
  }
  func.func @transform_2(%arg0: i32, %arg1: i32) -> (i32, i32) {
    %c0_i32 = arith.constant 0 : i32
    %c0_i32_0 = arith.constant 0 : i32
    return %arg1, %c0_i32 : i32, i32
  }
  func.func @transform_3(%arg0: i32, %arg1: i32) -> (i32, i32) {
    %c0_i32 = arith.constant 0 : i32
    %c0_i32_0 = arith.constant 0 : i32
    return %arg0, %c0_i32 : i32, i32
  }
}

</mosaic_0001>

<llo_original>
// kernel: tpu_custom_call.1
$region0: #{tpu_custom_call.1}
  #allocation0 [shape = 'u32[]', space=smem, size = 0x4, offset = 0x4, fixed_abs, tag = 'smem constant byte address 0x4 - core index']
  #allocation1 [shape = 'u32[144,128]{1,0:T(1,128)}', space=vmem, size = 0x12000, scoped, tag = 'internal scratch']
  #allocation2 [shape = 'f32[32,128]{1,0:T(8,128)}', space=vmem, size = 0x4000, scoped, tag = 'scratch operand']
  %s0 = inlined_call_operand.hbm [shape: bf16[32,128], index: 0, kind: input, shape index: {}]
  %s1 = inlined_call_operand.hbm [shape: bf16[1,128,1024], index: 1, kind: input, shape index: {}]
  %s2 = inlined_call_operand.hbm [shape: bf16[512,128], index: 2, kind: input, shape index: {}]
  %s3 = inlined_call_operand.hbm [shape: f32[32,128], index: 3, kind: output, shape index: {}]
  %s4 = sld [smem:[#allocation0]]
  $region42: #{tpu_custom_call.1} parent=0
    _
  %s6 = ssub.s32 1, %s4
  %s7 = scalar_select 0, %s6, %s4
  $region1: #{tpu_custom_call.1} parent=0
    #allocation3 [shape = 'u8[8192]{0}', space=vmem, size = 0x2000, scoped, tag = 'input window, operand 0, single buffered']
    #allocation4 [shape = 's32[1]{0}', space=sflag, size = 0x4, scoped, tag = 'scoped memory for tpu_custom_call.1']
    #allocation5 [shape = 's32[1]{0}', space=sflag, size = 0x4, scoped, tag = 'scoped memory for tpu_custom_call.1']
    #allocation6 [shape = 'u8[262144]{0}', space=vmem, size = 0x40000, scoped, tag = 'input window, operand 1, single buffered']
    #allocation7 [shape = 's32[1]{0}', space=sflag, size = 0x4, scoped, tag = 'scoped memory for tpu_custom_call.1']
    #allocation8 [shape = 'u8[131072]{0}', space=vmem, size = 0x20000, scoped, tag = 'input window, operand 2, single buffered']
    #allocation9 [shape = 'u8[16384]{0}', space=vmem, size = 0x4000, scoped, tag = 'output window, operand 0, single buffered']
    %8 = vsyncpa [#allocation4], 0
    %9 = vsyncpa [#allocation7], 0
    %10 = vsyncpa [#allocation5], 0
    // Predicated region
    $region2: #{tpu_custom_call.1} parent=1 // pred_check
      _
    $region3: #{tpu_custom_call.1} parent=1 // pred_check_branch
      %12 = sbr.rel (0) target = $region5
    $region4: #{tpu_custom_call.1} parent=1 // pred_region
      %s14 = ssub.s32 256, 256
      %15 = vsyncadd [#allocation4], %s14
      %s16 = sshll.u32 [#allocation3], 4
      %s17 = int_to_ptr.vmem [resolvable:$true] %s16
      %22 = dma.hbm_to_vmem [thread:$0]  %s0, 256, %s17, [#allocation4], 64, 64, 4
    $region5: #{tpu_custom_call.1} parent=1 // pred_fallthru
      _
    // Predicated region
    $region6: #{tpu_custom_call.1} parent=1 // pred_check
      _
    $region7: #{tpu_custom_call.1} parent=1 // pred_check_branch
      %24 = sbr.rel (0) target = $region9
    $region8: #{tpu_custom_call.1} parent=1 // pred_region
      %s26 = ssub.s32 8192, 8192
      %27 = vsyncadd [#allocation7], %s26
      %s28 = sshll.u32 [#allocation6], 4
      %s29 = int_to_ptr.vmem [resolvable:$true] %s28
      %34 = dma.hbm_to_vmem [thread:$0]  %s1, 8192, %s29, [#allocation7], 512, 512, 32
    $region9: #{tpu_custom_call.1} parent=1 // pred_fallthru
      _
    // Predicated region
    $region10: #{tpu_custom_call.1} parent=1 // pred_check
      _
    $region11: #{tpu_custom_call.1} parent=1 // pred_check_branch
      %36 = sbr.rel (0) target = $region13
    $region12: #{tpu_custom_call.1} parent=1 // pred_region
      %s38 = ssub.s32 4096, 4096
      %39 = vsyncadd [#allocation7], %s38
      %s40 = sshll.u32 [#allocation8], 4
      %s41 = int_to_ptr.vmem [resolvable:$true] %s40
      %46 = dma.hbm_to_vmem [thread:$0]  %s2, 4096, %s41, [#allocation7], 64, 64, 4
    $region13: #{tpu_custom_call.1} parent=1 // pred_fallthru
      _
    // Predicated region
    $region14: #{tpu_custom_call.1} parent=1 // pred_check
      _
    $region15: #{tpu_custom_call.1} parent=1 // pred_check_branch
      %48 = sbr.rel (0) target = $region17
    $region16: #{tpu_custom_call.1} parent=1 // pred_region
      %49 = dma.done [#allocation4], 256
    $region17: #{tpu_custom_call.1} parent=1 // pred_fallthru
      _
    // Predicated region
    $region18: #{tpu_custom_call.1} parent=1 // pred_check
      _
    $region19: #{tpu_custom_call.1} parent=1 // pred_check_branch
      %51 = sbr.rel (0) target = $region21
    $region20: #{tpu_custom_call.1} parent=1 // pred_region
      %52 = dma.done [#allocation7], 8192
    $region21: #{tpu_custom_call.1} parent=1 // pred_fallthru
      _
    // Predicated region
    $region22: #{tpu_custom_call.1} parent=1 // pred_check
      _
    $region23: #{tpu_custom_call.1} parent=1 // pred_check_branch
      %54 = sbr.rel (0) target = $region25
    $region24: #{tpu_custom_call.1} parent=1 // pred_region
      %55 = dma.done [#allocation7], 4096
    $region25: #{tpu_custom_call.1} parent=1 // pred_fallthru
      _
    %p57 = scmp.eq.s32.totalorder 0, 0
    // Predicated region
    $region26: #{tpu_custom_call.1} parent=1 // pred_check
      %p58 = pneg %p57
    $region27: #{tpu_custom_call.1} parent=1 // pred_check_branch
      %60 = sbr.rel (%p58) target = $region29
    $region28: #{tpu_custom_call.1} parent=1 // pred_region
      %61 = vst [vmem:[#allocation2] sm:$0xff] 0.0
      %62 = vst [vmem:[#allocation2 + $0x8] sm:$0xff] 0.0
      %63 = vst [vmem:[#allocation2 + $0x10] sm:$0xff] 0.0
      %64 = vst [vmem:[#allocation2 + $0x18] sm:$0xff] 0.0
    $region29: #{tpu_custom_call.1} parent=1 // pred_fallthru
      _
    %v65 = vld [vmem:[#allocation3] sm:$0xf]
    %v66 = vld [vmem:[#allocation3 + $0x4] sm:$0xf]
    %v67 = vld [vmem:[#allocation3 + $0x8] sm:$0xf]
    %v68 = vld [vmem:[#allocation3 + $0xc] sm:$0xf]
    %v69 = vld [vmem:[#allocation6] sm:$0xff]
    %v70 = vld [vmem:[#allocation6 + $0x8] sm:$0xff]
    %v71 = vld [vmem:[#allocation6 + $0x10] sm:$0xff]
    %v72 = vld [vmem:[#allocation6 + $0x18] sm:$0xff]
    %v73 = vld [vmem:[#allocation6 + $0x20] sm:$0xff]
    %v74 = vld [vmem:[#allocation6 + $0x28] sm:$0xff]
    %v75 = vld [vmem:[#allocation6 + $0x30] sm:$0xff]
    %v76 = vld [vmem:[#allocation6 + $0x38] sm:$0xff]
    %v77 = vld [vmem:[#allocation6 + $0x40] sm:$0xff]
    %v78 = vld [vmem:[#allocation6 + $0x48] sm:$0xff]
    %v79 = vld [vmem:[#allocation6 + $0x50] sm:$0xff]
    %v80 = vld [vmem:[#allocation6 + $0x58] sm:$0xff]
    %v81 = vld [vmem:[#allocation6 + $0x60] sm:$0xff]
    %v82 = vld [vmem:[#allocation6 + $0x68] sm:$0xff]
    %v83 = vld [vmem:[#allocation6 + $0x70] sm:$0xff]
    %v84 = vld [vmem:[#allocation6 + $0x78] sm:$0xff]
    %v85 = vld [vmem:[#allocation6 + $0x80] sm:$0xff]
    %v86 = vld [vmem:[#allocation6 + $0x88] sm:$0xff]
    %v87 = vld [vmem:[#allocation6 + $0x90] sm:$0xff]
    %v88 = vld [vmem:[#allocation6 + $0x98] sm:$0xff]
    %v89 = vld [vmem:[#allocation6 + $0xa0] sm:$0xff]
    %v90 = vld [vmem:[#allocation6 + $0xa8] sm:$0xff]
    %v91 = vld [vmem:[#allocation6 + $0xb0] sm:$0xff]
    %v92 = vld [vmem:[#allocation6 + $0xb8] sm:$0xff]
    %v93 = vld [vmem:[#allocation6 + $0xc0] sm:$0xff]
    %v94 = vld [vmem:[#allocation6 + $0xc8] sm:$0xff]
    %v95 = vld [vmem:[#allocation6 + $0xd0] sm:$0xff]
    %v96 = vld [vmem:[#allocation6 + $0xd8] sm:$0xff]
    %v97 = vld [vmem:[#allocation6 + $0xe0] sm:$0xff]
    %v98 = vld [vmem:[#allocation6 + $0xe8] sm:$0xff]
    %v99 = vld [vmem:[#allocation6 + $0xf0] sm:$0xff]
    %v100 = vld [vmem:[#allocation6 + $0xf8] sm:$0xff]
    %v101 = vld [vmem:[#allocation6 + $0x100] sm:$0xff]
    %v102 = vld [vmem:[#allocation6 + $0x108] sm:$0xff]
    %v103 = vld [vmem:[#allocation6 + $0x110] sm:$0xff]
    %v104 = vld [vmem:[#allocation6 + $0x118] sm:$0xff]
    %v105 = vld [vmem:[#allocation6 + $0x120] sm:$0xff]
    %v106 = vld [vmem:[#allocation6 + $0x128] sm:$0xff]
    %v107 = vld [vmem:[#allocation6 + $0x130] sm:$0xff]
    %v108 = vld [vmem:[#allocation6 + $0x138] sm:$0xff]
    %v109 = vld [vmem:[#allocation6 + $0x140] sm:$0xff]
    %v110 = vld [vmem:[#allocation6 + $0x148] sm:$0xff]
    %v111 = vld [vmem:[#allocation6 + $0x150] sm:$0xff]
    %v112 = vld [vmem:[#allocation6 + $0x158] sm:$0xff]
    %v113 = vld [vmem:[#allocation6 + $0x160] sm:$0xff]
    %v114 = vld [vmem:[#allocation6 + $0x168] sm:$0xff]
    %v115 = vld [vmem:[#allocation6 + $0x170] sm:$0xff]
    %v116 = vld [vmem:[#allocation6 + $0x178] sm:$0xff]
    %v117 = vld [vmem:[#allocation6 + $0x180] sm:$0xff]
    %v118 = vld [vmem:[#allocation6 + $0x188] sm:$0xff]
    %v119 = vld [vmem:[#allocation6 + $0x190] sm:$0xff]
    %v120 = vld [vmem:[#allocation6 + $0x198] sm:$0xff]
    %v121 = vld [vmem:[#allocation6 + $0x1a0] sm:$0xff]
    %v122 = vld [vmem:[#allocation6 + $0x1a8] sm:$0xff]
    %v123 = vld [vmem:[#allocation6 + $0x1b0] sm:$0xff]
    %v124 = vld [vmem:[#allocation6 + $0x1b8] sm:$0xff]
    %v125 = vld [vmem:[#allocation6 + $0x1c0] sm:$0xff]
    %v126 = vld [vmem:[#allocation6 + $0x1c8] sm:$0xff]
    %v127 = vld [vmem:[#allocation6 + $0x1d0] sm:$0xff]
    %v128 = vld [vmem:[#allocation6 + $0x1d8] sm:$0xff]
    %v129 = vld [vmem:[#allocation6 + $0x1e0] sm:$0xff]
    %v130 = vld [vmem:[#allocation6 + $0x1e8] sm:$0xff]
    %v131 = vld [vmem:[#allocation6 + $0x1f0] sm:$0xff]
    %v132 = vld [vmem:[#allocation6 + $0x1f8] sm:$0xff]
    %v137 = vunpack.c.l.b16 %v65
    %v138 = vunpack.c.l.b16 %v66
    %v139 = vunpack.c.l.b16 %v67
    %v140 = vunpack.c.l.b16 %v68
    %v141 = vpack.c.b16 %v138, %v137
    %v142 = vpack.c.b16 %v140, %v139
    %v209 = vunpack.c.l.b16 %v69
    %v210 = vunpack.c.h.b16 %v69
    %v211 = vunpack.c.l.b16 %v70
    %v212 = vunpack.c.h.b16 %v70
    %v213 = vunpack.c.l.b16 %v71
    %v214 = vunpack.c.h.b16 %v71
    %v215 = vunpack.c.l.b16 %v72
    %v216 = vunpack.c.h.b16 %v72
    %v217 = vunpack.c.l.b16 %v73
    %v218 = vunpack.c.h.b16 %v73
    %v219 = vunpack.c.l.b16 %v74
    %v220 = vunpack.c.h.b16 %v74
    %v221 = vunpack.c.l.b16 %v75
    %v222 = vunpack.c.h.b16 %v75
    %v223 = vunpack.c.l.b16 %v76
    %v224 = vunpack.c.h.b16 %v76
    %v225 = vunpack.c.l.b16 %v77
    %v226 = vunpack.c.h.b16 %v77
    %v227 = vunpack.c.l.b16 %v78
    %v228 = vunpack.c.h.b16 %v78
    %v229 = vunpack.c.l.b16 %v79
    %v230 = vunpack.c.h.b16 %v79
    %v231 = vunpack.c.l.b16 %v80
    %v232 = vunpack.c.h.b16 %v80
    %v233 = vunpack.c.l.b16 %v81
    %v234 = vunpack.c.h.b16 %v81
    %v235 = vunpack.c.l.b16 %v82
    %v236 = vunpack.c.h.b16 %v82
    %v237 = vunpack.c.l.b16 %v83
    %v238 = vunpack.c.h.b16 %v83
    %v239 = vunpack.c.l.b16 %v84
    %v240 = vunpack.c.h.b16 %v84
    %v241 = vunpack.c.l.b16 %v85
    %v242 = vunpack.c.h.b16 %v85
    %v243 = vunpack.c.l.b16 %v86
    %v244 = vunpack.c.h.b16 %v86
    %v245 = vunpack.c.l.b16 %v87
    %v246 = vunpack.c.h.b16 %v87
    %v247 = vunpack.c.l.b16 %v88
    %v248 = vunpack.c.h.b16 %v88
    %v249 = vunpack.c.l.b16 %v89
    %v250 = vunpack.c.h.b16 %v89
    %v251 = vunpack.c.l.b16 %v90
    %v252 = vunpack.c.h.b16 %v90
    %v253 = vunpack.c.l.b16 %v91
    %v254 = vunpack.c.h.b16 %v91
    %v255 = vunpack.c.l.b16 %v92
    %v256 = vunpack.c.h.b16 %v92
    %v257 = vunpack.c.l.b16 %v93
    %v258 = vunpack.c.h.b16 %v93
    %v259 = vunpack.c.l.b16 %v94
    %v260 = vunpack.c.h.b16 %v94
    %v261 = vunpack.c.l.b16 %v95
    %v262 = vunpack.c.h.b16 %v95
    %v263 = vunpack.c.l.b16 %v96
    %v264 = vunpack.c.h.b16 %v96
    %v265 = vunpack.c.l.b16 %v97
    %v266 = vunpack.c.h.b16 %v97
    %v267 = vunpack.c.l.b16 %v98
    %v268 = vunpack.c.h.b16 %v98
    %v269 = vunpack.c.l.b16 %v99
    %v270 = vunpack.c.h.b16 %v99
    %v271 = vunpack.c.l.b16 %v100
    %v272 = vunpack.c.h.b16 %v100
    %v273 = vunpack.c.l.b16 %v101
    %v274 = vunpack.c.h.b16 %v101
    %v275 = vunpack.c.l.b16 %v102
    %v276 = vunpack.c.h.b16 %v102
    %v277 = vunpack.c.l.b16 %v103
    %v278 = vunpack.c.h.b16 %v103
    %v279 = vunpack.c.l.b16 %v104
    %v280 = vunpack.c.h.b16 %v104
    %v281 = vunpack.c.l.b16 %v105
    %v282 = vunpack.c.h.b16 %v105
    %v283 = vunpack.c.l.b16 %v106
    %v284 = vunpack.c.h.b16 %v106
    %v285 = vunpack.c.l.b16 %v107
    %v286 = vunpack.c.h.b16 %v107
    %v287 = vunpack.c.l.b16 %v108
    %v288 = vunpack.c.h.b16 %v108
    %v289 = vunpack.c.l.b16 %v109
    %v290 = vunpack.c.h.b16 %v109
    %v291 = vunpack.c.l.b16 %v110
    %v292 = vunpack.c.h.b16 %v110
    %v293 = vunpack.c.l.b16 %v111
    %v294 = vunpack.c.h.b16 %v111
    %v295 = vunpack.c.l.b16 %v112
    %v296 = vunpack.c.h.b16 %v112
    %v297 = vunpack.c.l.b16 %v113
    %v298 = vunpack.c.h.b16 %v113
    %v299 = vunpack.c.l.b16 %v114
    %v300 = vunpack.c.h.b16 %v114
    %v301 = vunpack.c.l.b16 %v115
    %v302 = vunpack.c.h.b16 %v115
    %v303 = vunpack.c.l.b16 %v116
    %v304 = vunpack.c.h.b16 %v116
    %v305 = vunpack.c.l.b16 %v117
    %v306 = vunpack.c.h.b16 %v117
    %v307 = vunpack.c.l.b16 %v118
    %v308 = vunpack.c.h.b16 %v118
    %v309 = vunpack.c.l.b16 %v119
    %v310 = vunpack.c.h.b16 %v119
    %v311 = vunpack.c.l.b16 %v120
    %v312 = vunpack.c.h.b16 %v120
    %v313 = vunpack.c.l.b16 %v121
    %v314 = vunpack.c.h.b16 %v121
    %v315 = vunpack.c.l.b16 %v122
    %v316 = vunpack.c.h.b16 %v122
    %v317 = vunpack.c.l.b16 %v123
    %v318 = vunpack.c.h.b16 %v123
    %v319 = vunpack.c.l.b16 %v124
    %v320 = vunpack.c.h.b16 %v124
    %v321 = vunpack.c.l.b16 %v125
    %v322 = vunpack.c.h.b16 %v125
    %v323 = vunpack.c.l.b16 %v126
    %v324 = vunpack.c.h.b16 %v126
    %v325 = vunpack.c.l.b16 %v127
    %v326 = vunpack.c.h.b16 %v127
    %v327 = vunpack.c.l.b16 %v128
    %v328 = vunpack.c.h.b16 %v128
    %v329 = vunpack.c.l.b16 %v129
    %v330 = vunpack.c.h.b16 %v129
    %v331 = vunpack.c.l.b16 %v130
    %v332 = vunpack.c.h.b16 %v130
    %v333 = vunpack.c.l.b16 %v131
    %v334 = vunpack.c.h.b16 %v131
    %v335 = vunpack.c.l.b16 %v132
    %v336 = vunpack.c.h.b16 %v132
    %v337 = vpack.c.b16 %v217, %v209
    %v338 = vpack.c.b16 %v218, %v210
    %v339 = vpack.c.b16 %v219, %v211
    %v340 = vpack.c.b16 %v220, %v212
    %v341 = vpack.c.b16 %v221, %v213
    %v342 = vpack.c.b16 %v222, %v214
    %v343 = vpack.c.b16 %v223, %v215
    %v344 = vpack.c.b16 %v224, %v216
    %v345 = vpack.c.b16 %v233, %v225
    %v346 = vpack.c.b16 %v234, %v226
    %v347 = vpack.c.b16 %v235, %v227
    %v348 = vpack.c.b16 %v236, %v228
    %v349 = vpack.c.b16 %v237, %v229
    %v350 = vpack.c.b16 %v238, %v230
    %v351 = vpack.c.b16 %v239, %v231
    %v352 = vpack.c.b16 %v240, %v232
    %v353 = vpack.c.b16 %v249, %v241
    %v354 = vpack.c.b16 %v250, %v242
    %v355 = vpack.c.b16 %v251, %v243
    %v356 = vpack.c.b16 %v252, %v244
    %v357 = vpack.c.b16 %v253, %v245
    %v358 = vpack.c.b16 %v254, %v246
    %v359 = vpack.c.b16 %v255, %v247
    %v360 = vpack.c.b16 %v256, %v248
    %v361 = vpack.c.b16 %v265, %v257
    %v362 = vpack.c.b16 %v266, %v258
    %v363 = vpack.c.b16 %v267, %v259
    %v364 = vpack.c.b16 %v268, %v260
    %v365 = vpack.c.b16 %v269, %v261
    %v366 = vpack.c.b16 %v270, %v262
    %v367 = vpack.c.b16 %v271, %v263
    %v368 = vpack.c.b16 %v272, %v264
    %v369 = vpack.c.b16 %v281, %v273
    %v370 = vpack.c.b16 %v282, %v274
    %v371 = vpack.c.b16 %v283, %v275
    %v372 = vpack.c.b16 %v284, %v276
    %v373 = vpack.c.b16 %v285, %v277
    %v374 = vpack.c.b16 %v286, %v278
    %v375 = vpack.c.b16 %v287, %v279
    %v376 = vpack.c.b16 %v288, %v280
    %v377 = vpack.c.b16 %v297, %v289
    %v378 = vpack.c.b16 %v298, %v290
    %v379 = vpack.c.b16 %v299, %v291
    %v380 = vpack.c.b16 %v300, %v292
    %v381 = vpack.c.b16 %v301, %v293
    %v382 = vpack.c.b16 %v302, %v294
    %v383 = vpack.c.b16 %v303, %v295
    %v384 = vpack.c.b16 %v304, %v296
    %v385 = vpack.c.b16 %v313, %v305
    %v386 = vpack.c.b16 %v314, %v306
    %v387 = vpack.c.b16 %v315, %v307
    %v388 = vpack.c.b16 %v316, %v308
    %v389 = vpack.c.b16 %v317, %v309
    %v390 = vpack.c.b16 %v318, %v310
    %v391 = vpack.c.b16 %v319, %v311
    %v392 = vpack.c.b16 %v320, %v312
    %v393 = vpack.c.b16 %v329, %v321
    %v394 = vpack.c.b16 %v330, %v322
    %v395 = vpack.c.b16 %v331, %v323
    %v396 = vpack.c.b16 %v332, %v324
    %v397 = vpack.c.b16 %v333, %v325
    %v398 = vpack.c.b16 %v334, %v326
    %v399 = vpack.c.b16 %v335, %v327
    %v400 = vpack.c.b16 %v336, %v328
    %465 = vmatprep.subr.bf16.mxu0 %v338
    %466 = vmatpush1.bf16.msra.mxu0 %v337
    %467 = vmatprep.subr.bf16.mxu0 %v346
    %468 = vmatpush1.bf16.msra.mxu0 %v345
    %469 = vmatprep.subr.bf16.mxu0 %v354
    %470 = vmatpush1.bf16.msra.mxu0 %v353
    %471 = vmatprep.subr.bf16.mxu0 %v362
    %472 = vmatpush1.bf16.msra.mxu0 %v361
    %473 = vmatprep.subr.bf16.mxu0 %v370
    %474 = vmatpush1.bf16.msra.mxu0 %v369
    %475 = vmatprep.subr.bf16.mxu0 %v378
    %476 = vmatpush1.bf16.msra.mxu0 %v377
    %477 = vmatprep.subr.bf16.mxu0 %v386
    %478 = vmatpush1.bf16.msra.mxu0 %v385
    %479 = vmatprep.subr.bf16.mxu0 %v394
    %480 = vmatpush1.bf16.msra.mxu0 %v393
    %481 = vmatprep.subr.bf16.mxu0 0
    %482 = vmatpush1.bf16.msra.mxu0 0
    %483 = vmatprep.subr.bf16.mxu0 0
    %484 = vmatpush1.bf16.msra.mxu0 0
    %485 = vmatprep.subr.bf16.mxu0 0
    %486 = vmatpush1.bf16.msra.mxu0 0
    %487 = vmatprep.subr.bf16.mxu0 0
    %488 = vmatpush1.bf16.msra.mxu0 0
    %489 = vmatprep.subr.bf16.mxu0 0
    %490 = vmatpush1.bf16.msra.mxu0 0
    %491 = vmatprep.subr.bf16.mxu0 0
    %492 = vmatpush1.bf16.msra.mxu0 0
    %493 = vmatprep.subr.bf16.mxu0 0
    %494 = vmatpush1.bf16.msra.mxu0 0
    %495 = vmatprep.subr.bf16.mxu0 0
    %496 = vmatpush1.bf16.msra.mxu0 0
    %497 = vmatprep.mubr.bf16.mxu0 0
    %498 = vmatmul.mubr.bf16.gmra.mrb[0].mxu0 %v141
    %v499 = vpop.f32.mrb[0].mxu0
    %v500 = vadd.f32 0.0, %v499
    %v501 = vpop.f32.mrb[0].mxu0
    %v502 = vadd.f32 0.0, %v501
    %v503 = vpop.f32.mrb[0].mxu0
    %v504 = vadd.f32 0.0, %v503
    %v505 = vpop.f32.mrb[0].mxu0
    %v506 = vadd.f32 0.0, %v505
    %507 = vmatprep.mubr.bf16.mxu0 0
    %508 = vmatmul.mubr.bf16.gmra.mrb[0].mxu0 %v142
    %v509 = vpop.f32.mrb[0].mxu0
    %v510 = vadd.f32 0.0, %v509
    %v511 = vpop.f32.mrb[0].mxu0
    %v512 = vadd.f32 0.0, %v511
    %v513 = vpop.f32.mrb[0].mxu0
    %v514 = vadd.f32 0.0, %v513
    %v515 = vpop.f32.mrb[0].mxu0
    %v516 = vadd.f32 0.0, %v515
    %517 = vdwg.mxu0
    %518 = vmatprep.subr.bf16.mxu0 %v340
    %519 = vmatpush1.bf16.msra.mxu0 %v339
    %520 = vmatprep.subr.bf16.mxu0 %v348
    %521 = vmatpush1.bf16.msra.mxu0 %v347
    %522 = vmatprep.subr.bf16.mxu0 %v356
    %523 = vmatpush1.bf16.msra.mxu0 %v355
    %524 = vmatprep.subr.bf16.mxu0 %v364
    %525 = vmatpush1.bf16.msra.mxu0 %v363
    %526 = vmatprep.subr.bf16.mxu0 %v372
    %527 = vmatpush1.bf16.msra.mxu0 %v371
    %528 = vmatprep.subr.bf16.mxu0 %v380
    %529 = vmatpush1.bf16.msra.mxu0 %v379
    %530 = vmatprep.subr.bf16.mxu0 %v388
    %531 = vmatpush1.bf16.msra.mxu0 %v387
    %532 = vmatprep.subr.bf16.mxu0 %v396
    %533 = vmatpush1.bf16.msra.mxu0 %v395
    %534 = vmatprep.subr.bf16.mxu0 0
    %535 = vmatpush1.bf16.msra.mxu0 0
    %536 = vmatprep.subr.bf16.mxu0 0
    %537 = vmatpush1.bf16.msra.mxu0 0
    %538 = vmatprep.subr.bf16.mxu0 0
    %539 = vmatpush1.bf16.msra.mxu0 0
    %540 = vmatprep.subr.bf16.mxu0 0
    %541 = vmatpush1.bf16.msra.mxu0 0
    %542 = vmatprep.subr.bf16.mxu0 0
    %543 = vmatpush1.bf16.msra.mxu0 0
    %544 = vmatprep.subr.bf16.mxu0 0
    %545 = vmatpush1.bf16.msra.mxu0 0
    %546 = vmatprep.subr.bf16.mxu0 0
    %547 = vmatpush1.bf16.msra.mxu0 0
    %548 = vmatprep.subr.bf16.mxu0 0
    %549 = vmatpush1.bf16.msra.mxu0 0
    %550 = vmatprep.mubr.bf16.mxu0 0
    %551 = vmatmul.mubr.bf16.gmra.mrb[0].mxu0 %v141
    %v552 = vpop.f32.mrb[0].mxu0
    %v553 = vadd.f32 0.0, %v552
    %v554 = vpop.f32.mrb[0].mxu0
    %v555 = vadd.f32 0.0, %v554
    %v556 = vpop.f32.mrb[0].mxu0
    %v557 = vadd.f32 0.0, %v556
    %v558 = vpop.f32.mrb[0].mxu0
    %v559 = vadd.f32 0.0, %v558
    %560 = vmatprep.mubr.bf16.mxu0 0
    %561 = vmatmul.mubr.bf16.gmra.mrb[0].mxu0 %v142
    %v562 = vpop.f32.mrb[0].mxu0
    %v563 = vadd.f32 0.0, %v562
    %v564 = vpop.f32.mrb[0].mxu0
    %v565 = vadd.f32 0.0, %v564
    %v566 = vpop.f32.mrb[0].mxu0
    %v567 = vadd.f32 0.0, %v566
    %v568 = vpop.f32.mrb[0].mxu0
    %v569 = vadd.f32 0.0, %v568
    %570 = vdwg.mxu0
    %571 = vmatprep.subr.bf16.mxu0 %v342
    %572 = vmatpush1.bf16.msra.mxu0 %v341
    %573 = vmatprep.subr.bf16.mxu0 %v350
    %574 = vmatpush1.bf16.msra.mxu0 %v349
    %575 = vmatprep.subr.bf16.mxu0 %v358
    %576 = vmatpush1.bf16.msra.mxu0 %v357
    %577 = vmatprep.subr.bf16.mxu0 %v366
    %578 = vmatpush1.bf16.msra.mxu0 %v365
    %579 = vmatprep.subr.bf16.mxu0 %v374
    %580 = vmatpush1.bf16.msra.mxu0 %v373
    %581 = vmatprep.subr.bf16.mxu0 %v382
    %582 = vmatpush1.bf16.msra.mxu0 %v381
    %583 = vmatprep.subr.bf16.mxu0 %v390
    %584 = vmatpush1.bf16.msra.mxu0 %v389
    %585 = vmatprep.subr.bf16.mxu0 %v398
    %586 = vmatpush1.bf16.msra.mxu0 %v397
    %587 = vmatprep.subr.bf16.mxu0 0
    %588 = vmatpush1.bf16.msra.mxu0 0
    %589 = vmatprep.subr.bf16.mxu0 0
    %590 = vmatpush1.bf16.msra.mxu0 0
    %591 = vmatprep.subr.bf16.mxu0 0
    %592 = vmatpush1.bf16.msra.mxu0 0
    %593 = vmatprep.subr.bf16.mxu0 0
    %594 = vmatpush1.bf16.msra.mxu0 0
    %595 = vmatprep.subr.bf16.mxu0 0
    %596 = vmatpush1.bf16.msra.mxu0 0
    %597 = vmatprep.subr.bf16.mxu0 0
    %598 = vmatpush1.bf16.msra.mxu0 0
    %599 = vmatprep.subr.bf16.mxu0 0
    %600 = vmatpush1.bf16.msra.mxu0 0
    %601 = vmatprep.subr.bf16.mxu0 0
    %602 = vmatpush1.bf16.msra.mxu0 0
    %603 = vmatprep.mubr.bf16.mxu0 0
    %604 = vmatmul.mubr.bf16.gmra.mrb[0].mxu0 %v141
    %v605 = vpop.f32.mrb[0].mxu0
    %v606 = vadd.f32 0.0, %v605
    %v607 = vpop.f32.mrb[0].mxu0
    %v608 = vadd.f32 0.0, %v607
    %v609 = vpop.f32.mrb[0].mxu0
    %v610 = vadd.f32 0.0, %v609
    %v611 = vpop.f32.mrb[0].mxu0
    %v612 = vadd.f32 0.0, %v611
    %613 = vmatprep.mubr.bf16.mxu0 0
    %614 = vmatmul.mubr.bf16.gmra.mrb[0].mxu0 %v142
    %v615 = vpop.f32.mrb[0].mxu0
    %v616 = vadd.f32 0.0, %v615
    %v617 = vpop.f32.mrb[0].mxu0
    %v618 = vadd.f32 0.0, %v617
    %v619 = vpop.f32.mrb[0].mxu0
    %v620 = vadd.f32 0.0, %v619
    %v621 = vpop.f32.mrb[0].mxu0
    %v622 = vadd.f32 0.0, %v621
    %623 = vdwg.mxu0
    %624 = vmatprep.subr.bf16.mxu0 %v344
    %625 = vmatpush1.bf16.msra.mxu0 %v343
    %626 = vmatprep.subr.bf16.mxu0 %v352
    %627 = vmatpush1.bf16.msra.mxu0 %v351
    %628 = vmatprep.subr.bf16.mxu0 %v360
    %629 = vmatpush1.bf16.msra.mxu0 %v359
    %630 = vmatprep.subr.bf16.mxu0 %v368
    %631 = vmatpush1.bf16.msra.mxu0 %v367
    %632 = vmatprep.subr.bf16.mxu0 %v376
    %633 = vmatpush1.bf16.msra.mxu0 %v375
    %634 = vmatprep.subr.bf16.mxu0 %v384
    %635 = vmatpush1.bf16.msra.mxu0 %v383
    %636 = vmatprep.subr.bf16.mxu0 %v392
    %637 = vmatpush1.bf16.msra.mxu0 %v391
    %638 = vmatprep.subr.bf16.mxu0 %v400
    %639 = vmatpush1.bf16.msra.mxu0 %v399
    %640 = vmatprep.subr.bf16.mxu0 0
    %641 = vmatpush1.bf16.msra.mxu0 0
    %642 = vmatprep.subr.bf16.mxu0 0
    %643 = vmatpush1.bf16.msra.mxu0 0
    %644 = vmatprep.subr.bf16.mxu0 0
    %645 = vmatpush1.bf16.msra.mxu0 0
    %646 = vmatprep.subr.bf16.mxu0 0
    %647 = vmatpush1.bf16.msra.mxu0 0
    %648 = vmatprep.subr.bf16.mxu0 0
    %649 = vmatpush1.bf16.msra.mxu0 0
    %650 = vmatprep.subr.bf16.mxu0 0
    %651 = vmatpush1.bf16.msra.mxu0 0
    %652 = vmatprep.subr.bf16.mxu0 0
    %653 = vmatpush1.bf16.msra.mxu0 0
    %654 = vmatprep.subr.bf16.mxu0 0
    %655 = vmatpush1.bf16.msra.mxu0 0
    %656 = vmatprep.mubr.bf16.mxu0 0
    %657 = vmatmul.mubr.bf16.gmra.mrb[0].mxu0 %v141
    %v658 = vpop.f32.mrb[0].mxu0
    %v659 = vadd.f32 0.0, %v658
    %v660 = vpop.f32.mrb[0].mxu0
    %v661 = vadd.f32 0.0, %v660
    %v662 = vpop.f32.mrb[0].mxu0
    %v663 = vadd.f32 0.0, %v662
    %v664 = vpop.f32.mrb[0].mxu0
    %v665 = vadd.f32 0.0, %v664
    %666 = vmatprep.mubr.bf16.mxu0 0
    %667 = vmatmul.mubr.bf16.gmra.mrb[0].mxu0 %v142
    %v668 = vpop.f32.mrb[0].mxu0
    %v669 = vadd.f32 0.0, %v668
    %v670 = vpop.f32.mrb[0].mxu0
    %v671 = vadd.f32 0.0, %v670
    %v672 = vpop.f32.mrb[0].mxu0
    %v673 = vadd.f32 0.0, %v672
    %v674 = vpop.f32.mrb[0].mxu0
    %v675 = vadd.f32 0.0, %v674
    %676 = vdwg.mxu0
    %v677 = vxor.u32 %v500, 2147483648
    %v678 = vxor.u32 %v502, 2147483648
    %v679 = vxor.u32 %v553, 2147483648
    %v680 = vxor.u32 %v555, 2147483648
    %v681 = vxor.u32 %v504, 2147483648
    %v682 = vxor.u32 %v506, 2147483648
    %v683 = vxor.u32 %v557, 2147483648
    %v684 = vxor.u32 %v559, 2147483648
    %v685 = vxor.u32 %v510, 2147483648
    %v686 = vxor.u32 %v512, 2147483648
    %v687 = vxor.u32 %v563, 2147483648
    %v688 = vxor.u32 %v565, 2147483648
    %v689 = vxor.u32 %v514, 2147483648
    %v690 = vxor.u32 %v516, 2147483648
    %v691 = vxor.u32 %v567, 2147483648
    %v692 = vxor.u32 %v569, 2147483648
    %v693 = vmul.f32 %v677, 1.442695
    %v694 = vpow.pop %v693
    %v695 = vmul.f32 %v678, 1.442695
    %v696 = vpow.pop %v695
    %v697 = vmul.f32 %v679, 1.442695
    %v698 = vpow.pop %v697
    %v699 = vmul.f32 %v680, 1.442695
    %v700 = vpow.pop %v699
    %v701 = vmul.f32 %v681, 1.442695
    %v702 = vpow.pop %v701
    %v703 = vmul.f32 %v682, 1.442695
    %v704 = vpow.pop %v703
    %v705 = vmul.f32 %v683, 1.442695
    %v706 = vpow.pop %v705
    %v707 = vmul.f32 %v684, 1.442695
    %v708 = vpow.pop %v707
    %v709 = vmul.f32 %v685, 1.442695
    %v710 = vpow.pop %v709
    %v711 = vmul.f32 %v686, 1.442695
    %v712 = vpow.pop %v711
    %v713 = vmul.f32 %v687, 1.442695
    %v714 = vpow.pop %v713
    %v715 = vmul.f32 %v688, 1.442695
    %v716 = vpow.pop %v715
    %v717 = vmul.f32 %v689, 1.442695
    %v718 = vpow.pop %v717
    %v719 = vmul.f32 %v690, 1.442695
    %v720 = vpow.pop %v719
    %v721 = vmul.f32 %v691, 1.442695
    %v722 = vpow.pop %v721
    %v723 = vmul.f32 %v692, 1.442695
    %v724 = vpow.pop %v723
    %v725 = vadd.f32 %v694, 1.0
    %v726 = vadd.f32 %v696, 1.0
    %v727 = vadd.f32 %v698, 1.0
    %v728 = vadd.f32 %v700, 1.0
    %v729 = vadd.f32 %v702, 1.0
    %v730 = vadd.f32 %v704, 1.0
    %v731 = vadd.f32 %v706, 1.0
    %v732 = vadd.f32 %v708, 1.0
    %v733 = vadd.f32 %v710, 1.0
    %v734 = vadd.f32 %v712, 1.0
    %v735 = vadd.f32 %v714, 1.0
    %v736 = vadd.f32 %v716, 1.0
    %v737 = vadd.f32 %v718, 1.0
    %v738 = vadd.f32 %v720, 1.0
    %v739 = vadd.f32 %v722, 1.0
    %v740 = vadd.f32 %v724, 1.0
    %v741 = vrcp.pop %v725
    %v742 = vmul.f32 1.0, %v741
    %v743 = vrcp.pop %v726
    %v744 = vmul.f32 1.0, %v743
    %v745 = vrcp.pop %v727
    %v746 = vmul.f32 1.0, %v745
    %v747 = vrcp.pop %v728
    %v748 = vmul.f32 1.0, %v747
    %v749 = vrcp.pop %v729
    %v750 = vmul.f32 1.0, %v749
    %v751 = vrcp.pop %v730
    %v752 = vmul.f32 1.0, %v751
    %v753 = vrcp.pop %v731
    %v754 = vmul.f32 1.0, %v753
    %v755 = vrcp.pop %v732
    %v756 = vmul.f32 1.0, %v755
    %v757 = vrcp.pop %v733
    %v758 = vmul.f32 1.0, %v757
    %v759 = vrcp.pop %v734
    %v760 = vmul.f32 1.0, %v759
    %v761 = vrcp.pop %v735
    %v762 = vmul.f32 1.0, %v761
    %v763 = vrcp.pop %v736
    %v764 = vmul.f32 1.0, %v763
    %v765 = vrcp.pop %v737
    %v766 = vmul.f32 1.0, %v765
    %v767 = vrcp.pop %v738
    %v768 = vmul.f32 1.0, %v767
    %v769 = vrcp.pop %v739
    %v770 = vmul.f32 1.0, %v769
    %v771 = vrcp.pop %v740
    %v772 = vmul.f32 1.0, %v771
    %v773 = vmul.f32 %v500, %v742
    %v774 = vmul.f32 %v502, %v744
    %v775 = vmul.f32 %v553, %v746
    %v776 = vmul.f32 %v555, %v748
    %v777 = vmul.f32 %v504, %v750
    %v778 = vmul.f32 %v506, %v752
    %v779 = vmul.f32 %v557, %v754
    %v780 = vmul.f32 %v559, %v756
    %v781 = vmul.f32 %v510, %v758
    %v782 = vmul.f32 %v512, %v760
    %v783 = vmul.f32 %v563, %v762
    %v784 = vmul.f32 %v565, %v764
    %v785 = vmul.f32 %v514, %v766
    %v786 = vmul.f32 %v516, %v768
    %v787 = vmul.f32 %v567, %v770
    %v788 = vmul.f32 %v569, %v772
    %v789 = vmul.f32 %v773, %v606
    %v790 = vmul.f32 %v774, %v608
    %v791 = vmul.f32 %v775, %v659
    %v792 = vmul.f32 %v776, %v661
    %v793 = vmul.f32 %v777, %v610
    %v794 = vmul.f32 %v778, %v612
    %v795 = vmul.f32 %v779, %v663
    %v796 = vmul.f32 %v780, %v665
    %v797 = vmul.f32 %v781, %v616
    %v798 = vmul.f32 %v782, %v618
    %v799 = vmul.f32 %v783, %v669
    %v800 = vmul.f32 %v784, %v671
    %v801 = vmul.f32 %v785, %v620
    %v802 = vmul.f32 %v786, %v622
    %v803 = vmul.f32 %v787, %v673
    %v804 = vmul.f32 %v788, %v675
    %v805 = vld [vmem:[#allocation2] sm:$0xff]
    %v806 = vld [vmem:[#allocation2 + $0x8] sm:$0xff]
    %v807 = vld [vmem:[#allocation2 + $0x10] sm:$0xff]
    %v808 = vld [vmem:[#allocation2 + $0x18] sm:$0xff]
    %v809 = vpack.c.bf16 %v793, %v789
    %v810 = vpack.c.bf16 %v794, %v790
    %v811 = vpack.c.bf16 %v795, %v791
    %v812 = vpack.c.bf16 %v796, %v792
    %v813 = vpack.c.bf16 %v801, %v797
    %v814 = vpack.c.bf16 %v802, %v798
    %v815 = vpack.c.bf16 %v803, %v799
    %v816 = vpack.c.bf16 %v804, %v800
    %v817 = vld [vmem:[#allocation8] sm:$0xf]
    %v818 = vld [vmem:[#allocation8 + $0x4] sm:$0xf]
    %v819 = vld [vmem:[#allocation8 + $0x8] sm:$0xf]
    %v820 = vld [vmem:[#allocation8 + $0xc] sm:$0xf]
    %v821 = vld [vmem:[#allocation8 + $0x10] sm:$0xf]
    %v822 = vld [vmem:[#allocation8 + $0x14] sm:$0xf]
    %v823 = vld [vmem:[#allocation8 + $0x18] sm:$0xf]
    %v824 = vld [vmem:[#allocation8 + $0x1c] sm:$0xf]
    %v825 = vld [vmem:[#allocation8 + $0x20] sm:$0xf]
    %v826 = vld [vmem:[#allocation8 + $0x24] sm:$0xf]
    %v827 = vld [vmem:[#allocation8 + $0x28] sm:$0xf]
    %v828 = vld [vmem:[#allocation8 + $0x2c] sm:$0xf]
    %v829 = vld [vmem:[#allocation8 + $0x30] sm:$0xf]
    %v830 = vld [vmem:[#allocation8 + $0x34] sm:$0xf]
    %v831 = vld [vmem:[#allocation8 + $0x38] sm:$0xf]
    %v832 = vld [vmem:[#allocation8 + $0x3c] sm:$0xf]
    %v833 = vld [vmem:[#allocation8 + $0x40] sm:$0xf]
    %v834 = vld [vmem:[#allocation8 + $0x44] sm:$0xf]
    %v835 = vld [vmem:[#allocation8 + $0x48] sm:$0xf]
    %v836 = vld [vmem:[#allocation8 + $0x4c] sm:$0xf]
    %v837 = vld [vmem:[#allocation8 + $0x50] sm:$0xf]
    %v838 = vld [vmem:[#allocation8 + $0x54] sm:$0xf]
    %v839 = vld [vmem:[#allocation8 + $0x58] sm:$0xf]
    %v840 = vld [vmem:[#allocation8 + $0x5c] sm:$0xf]
    %v841 = vld [vmem:[#allocation8 + $0x60] sm:$0xf]
    %v842 = vld [vmem:[#allocation8 + $0x64] sm:$0xf]
    %v843 = vld [vmem:[#allocation8 + $0x68] sm:$0xf]
    %v844 = vld [vmem:[#allocation8 + $0x6c] sm:$0xf]
    %v845 = vld [vmem:[#allocation8 + $0x70] sm:$0xf]
    %v846 = vld [vmem:[#allocation8 + $0x74] sm:$0xf]
    %v847 = vld [vmem:[#allocation8 + $0x78] sm:$0xf]
    %v848 = vld [vmem:[#allocation8 + $0x7c] sm:$0xf]
    %v849 = vld [vmem:[#allocation8 + $0x80] sm:$0xf]
    %v850 = vld [vmem:[#allocation8 + $0x84] sm:$0xf]
    %v851 = vld [vmem:[#allocation8 + $0x88] sm:$0xf]
    %v852 = vld [vmem:[#allocation8 + $0x8c] sm:$0xf]
    %v853 = vld [vmem:[#allocation8 + $0x90] sm:$0xf]
    %v854 = vld [vmem:[#allocation8 + $0x94] sm:$0xf]
    %v855 = vld [vmem:[#allocation8 + $0x98] sm:$0xf]
    %v856 = vld [vmem:[#allocation8 + $0x9c] sm:$0xf]
    %v857 = vld [vmem:[#allocation8 + $0xa0] sm:$0xf]
    %v858 = vld [vmem:[#allocation8 + $0xa4] sm:$0xf]
    %v859 = vld [vmem:[#allocation8 + $0xa8] sm:$0xf]
    %v860 = vld [vmem:[#allocation8 + $0xac] sm:$0xf]
    %v861 = vld [vmem:[#allocation8 + $0xb0] sm:$0xf]
    %v862 = vld [vmem:[#allocation8 + $0xb4] sm:$0xf]
    %v863 = vld [vmem:[#allocation8 + $0xb8] sm:$0xf]
    %v864 = vld [vmem:[#allocation8 + $0xbc] sm:$0xf]
    %v865 = vld [vmem:[#allocation8 + $0xc0] sm:$0xf]
    %v866 = vld [vmem:[#allocation8 + $0xc4] sm:$0xf]
    %v867 = vld [vmem:[#allocation8 + $0xc8] sm:$0xf]
    %v868 = vld [vmem:[#allocation8 + $0xcc] sm:$0xf]
    %v869 = vld [vmem:[#allocation8 + $0xd0] sm:$0xf]
    %v870 = vld [vmem:[#allocation8 + $0xd4] sm:$0xf]
    %v871 = vld [vmem:[#allocation8 + $0xd8] sm:$0xf]
    %v872 = vld [vmem:[#allocation8 + $0xdc] sm:$0xf]
    %v873 = vld [vmem:[#allocation8 + $0xe0] sm:$0xf]
    %v874 = vld [vmem:[#allocation8 + $0xe4] sm:$0xf]
    %v875 = vld [vmem:[#allocation8 + $0xe8] sm:$0xf]
    %v876 = vld [vmem:[#allocation8 + $0xec] sm:$0xf]
    %v877 = vld [vmem:[#allocation8 + $0xf0] sm:$0xf]
    %v878 = vld [vmem:[#allocation8 + $0xf4] sm:$0xf]
    %v879 = vld [vmem:[#allocation8 + $0xf8] sm:$0xf]
    %v880 = vld [vmem:[#allocation8 + $0xfc] sm:$0xf]
    %v945 = vunpack.c.l.b16 %v817
    %v946 = vunpack.c.l.b16 %v818
    %v947 = vunpack.c.l.b16 %v819
    %v948 = vunpack.c.l.b16 %v820
    %v949 = vunpack.c.l.b16 %v821
    %v950 = vunpack.c.l.b16 %v822
    %v951 = vunpack.c.l.b16 %v823
    %v952 = vunpack.c.l.b16 %v824
    %v953 = vunpack.c.l.b16 %v825
    %v954 = vunpack.c.l.b16 %v826
    %v955 = vunpack.c.l.b16 %v827
    %v956 = vunpack.c.l.b16 %v828
    %v957 = vunpack.c.l.b16 %v829
    %v958 = vunpack.c.l.b16 %v830
    %v959 = vunpack.c.l.b16 %v831
    %v960 = vunpack.c.l.b16 %v832
    %v961 = vunpack.c.l.b16 %v833
    %v962 = vunpack.c.l.b16 %v834
    %v963 = vunpack.c.l.b16 %v835
    %v964 = vunpack.c.l.b16 %v836
    %v965 = vunpack.c.l.b16 %v837
    %v966 = vunpack.c.l.b16 %v838
    %v967 = vunpack.c.l.b16 %v839
    %v968 = vunpack.c.l.b16 %v840
    %v969 = vunpack.c.l.b16 %v841
    %v970 = vunpack.c.l.b16 %v842
    %v971 = vunpack.c.l.b16 %v843
    %v972 = vunpack.c.l.b16 %v844
    %v973 = vunpack.c.l.b16 %v845
    %v974 = vunpack.c.l.b16 %v846
    %v975 = vunpack.c.l.b16 %v847
    %v976 = vunpack.c.l.b16 %v848
    %v977 = vunpack.c.l.b16 %v849
    %v978 = vunpack.c.l.b16 %v850
    %v979 = vunpack.c.l.b16 %v851
    %v980 = vunpack.c.l.b16 %v852
    %v981 = vunpack.c.l.b16 %v853
    %v982 = vunpack.c.l.b16 %v854
    %v983 = vunpack.c.l.b16 %v855
    %v984 = vunpack.c.l.b16 %v856
    %v985 = vunpack.c.l.b16 %v857
    %v986 = vunpack.c.l.b16 %v858
    %v987 = vunpack.c.l.b16 %v859
    %v988 = vunpack.c.l.b16 %v860
    %v989 = vunpack.c.l.b16 %v861
    %v990 = vunpack.c.l.b16 %v862
    %v991 = vunpack.c.l.b16 %v863
    %v992 = vunpack.c.l.b16 %v864
    %v993 = vunpack.c.l.b16 %v865
    %v994 = vunpack.c.l.b16 %v866
    %v995 = vunpack.c.l.b16 %v867
    %v996 = vunpack.c.l.b16 %v868
    %v997 = vunpack.c.l.b16 %v869
    %v998 = vunpack.c.l.b16 %v870
    %v999 = vunpack.c.l.b16 %v871
    %v1000 = vunpack.c.l.b16 %v872
    %v1001 = vunpack.c.l.b16 %v873
    %v1002 = vunpack.c.l.b16 %v874
    %v1003 = vunpack.c.l.b16 %v875
    %v1004 = vunpack.c.l.b16 %v876
    %v1005 = vunpack.c.l.b16 %v877
    %v1006 = vunpack.c.l.b16 %v878
    %v1007 = vunpack.c.l.b16 %v879
    %v1008 = vunpack.c.l.b16 %v880
    %v1009 = vpack.c.b16 %v946, %v945
    %v1010 = vpack.c.b16 %v948, %v947
    %v1011 = vpack.c.b16 %v950, %v949
    %v1012 = vpack.c.b16 %v952, %v951
    %v1013 = vpack.c.b16 %v954, %v953
    %v1014 = vpack.c.b16 %v956, %v955
    %v1015 = vpack.c.b16 %v958, %v957
    %v1016 = vpack.c.b16 %v960, %v959
    %v1017 = vpack.c.b16 %v962, %v961
    %v1018 = vpack.c.b16 %v964, %v963
    %v1019 = vpack.c.b16 %v966, %v965
    %v1020 = vpack.c.b16 %v968, %v967
    %v1021 = vpack.c.b16 %v970, %v969
    %v1022 = vpack.c.b16 %v972, %v971
    %v1023 = vpack.c.b16 %v974, %v973
    %v1024 = vpack.c.b16 %v976, %v975
    %v1025 = vpack.c.b16 %v978, %v977
    %v1026 = vpack.c.b16 %v980, %v979
    %v1027 = vpack.c.b16 %v982, %v981
    %v1028 = vpack.c.b16 %v984, %v983
    %v1029 = vpack.c.b16 %v986, %v985
    %v1030 = vpack.c.b16 %v988, %v987
    %v1031 = vpack.c.b16 %v990, %v989
    %v1032 = vpack.c.b16 %v992, %v991
    %v1033 = vpack.c.b16 %v994, %v993
    %v1034 = vpack.c.b16 %v996, %v995
    %v1035 = vpack.c.b16 %v998, %v997
    %v1036 = vpack.c.b16 %v1000, %v999
    %v1037 = vpack.c.b16 %v1002, %v1001
    %v1038 = vpack.c.b16 %v1004, %v1003
    %v1039 = vpack.c.b16 %v1006, %v1005
    %v1040 = vpack.c.b16 %v1008, %v1007
    %1073 = vmatprep.subr.bf16.mxu0 0
    %1074 = vmatpush1.bf16.msra.mxu0 %v1009
    %1075 = vmatprep.subr.bf16.mxu0 0
    %1076 = vmatpush1.bf16.msra.mxu0 %v1010
    %1077 = vmatprep.subr.bf16.mxu0 0
    %1078 = vmatpush1.bf16.msra.mxu0 %v1011
    %1079 = vmatprep.subr.bf16.mxu0 0
    %1080 = vmatpush1.bf16.msra.mxu0 %v1012
    %1081 = vmatprep.subr.bf16.mxu0 0
    %1082 = vmatpush1.bf16.msra.mxu0 %v1013
    %1083 = vmatprep.subr.bf16.mxu0 0
    %1084 = vmatpush1.bf16.msra.mxu0 %v1014
    %1085 = vmatprep.subr.bf16.mxu0 0
    %1086 = vmatpush1.bf16.msra.mxu0 %v1015
    %1087 = vmatprep.subr.bf16.mxu0 0
    %1088 = vmatpush1.bf16.msra.mxu0 %v1016
    %1089 = vmatprep.subr.bf16.mxu0 0
    %1090 = vmatpush1.bf16.msra.mxu0 %v1017
    %1091 = vmatprep.subr.bf16.mxu0 0
    %1092 = vmatpush1.bf16.msra.mxu0 %v1018
    %1093 = vmatprep.subr.bf16.mxu0 0
    %1094 = vmatpush1.bf16.msra.mxu0 %v1019
    %1095 = vmatprep.subr.bf16.mxu0 0
    %1096 = vmatpush1.bf16.msra.mxu0 %v1020
    %1097 = vmatprep.subr.bf16.mxu0 0
    %1098 = vmatpush1.bf16.msra.mxu0 %v1021
    %1099 = vmatprep.subr.bf16.mxu0 0
    %1100 = vmatpush1.bf16.msra.mxu0 %v1022
    %1101 = vmatprep.subr.bf16.mxu0 0
    %1102 = vmatpush1.bf16.msra.mxu0 %v1023
    %1103 = vmatprep.subr.bf16.mxu0 0
    %1104 = vmatpush1.bf16.msra.mxu0 %v1024
    %1105 = vmatprep.mubr.bf16.mxu0 %v810
    %1106 = vmatmul.mubr.bf16.gmra.mrb[0].mxu0 %v809
    %v1107 = vpop.f32.mrb[0].mxu0
    %v1108 = vadd.f32 0.0, %v1107
    %v1109 = vpop.f32.mrb[0].mxu0
    %v1110 = vpop.f32.mrb[0].mxu0
    %v1111 = vadd.f32 0.0, %v1110
    %v1112 = vpop.f32.mrb[0].mxu0
    %1113 = vmatprep.mubr.bf16.mxu0 %v814
    %1114 = vmatmul.mubr.bf16.gmra.mrb[0].mxu0 %v813
    %v1115 = vpop.f32.mrb[0].mxu0
    %v1116 = vadd.f32 0.0, %v1115
    %v1117 = vpop.f32.mrb[0].mxu0
    %v1118 = vpop.f32.mrb[0].mxu0
    %v1119 = vadd.f32 0.0, %v1118
    %v1120 = vpop.f32.mrb[0].mxu0
    %1121 = vdwg.mxu0
    %1122 = vmatprep.subr.bf16.mxu0 0
    %1123 = vmatpush1.bf16.msra.mxu0 %v1025
    %1124 = vmatprep.subr.bf16.mxu0 0
    %1125 = vmatpush1.bf16.msra.mxu0 %v1026
    %1126 = vmatprep.subr.bf16.mxu0 0
    %1127 = vmatpush1.bf16.msra.mxu0 %v1027
    %1128 = vmatprep.subr.bf16.mxu0 0
    %1129 = vmatpush1.bf16.msra.mxu0 %v1028
    %1130 = vmatprep.subr.bf16.mxu0 0
    %1131 = vmatpush1.bf16.msra.mxu0 %v1029
    %1132 = vmatprep.subr.bf16.mxu0 0
    %1133 = vmatpush1.bf16.msra.mxu0 %v1030
    %1134 = vmatprep.subr.bf16.mxu0 0
    %1135 = vmatpush1.bf16.msra.mxu0 %v1031
    %1136 = vmatprep.subr.bf16.mxu0 0
    %1137 = vmatpush1.bf16.msra.mxu0 %v1032
    %1138 = vmatprep.subr.bf16.mxu0 0
    %1139 = vmatpush1.bf16.msra.mxu0 %v1033
    %1140 = vmatprep.subr.bf16.mxu0 0
    %1141 = vmatpush1.bf16.msra.mxu0 %v1034
    %1142 = vmatprep.subr.bf16.mxu0 0
    %1143 = vmatpush1.bf16.msra.mxu0 %v1035
    %1144 = vmatprep.subr.bf16.mxu0 0
    %1145 = vmatpush1.bf16.msra.mxu0 %v1036
    %1146 = vmatprep.subr.bf16.mxu0 0
    %1147 = vmatpush1.bf16.msra.mxu0 %v1037
    %1148 = vmatprep.subr.bf16.mxu0 0
    %1149 = vmatpush1.bf16.msra.mxu0 %v1038
    %1150 = vmatprep.subr.bf16.mxu0 0
    %1151 = vmatpush1.bf16.msra.mxu0 %v1039
    %1152 = vmatprep.subr.bf16.mxu0 0
    %1153 = vmatpush1.bf16.msra.mxu0 %v1040
    %1154 = vmatprep.mubr.bf16.mxu0 %v812
    %1155 = vmatmul.mubr.bf16.gmra.mrb[0].mxu0 %v811
    %v1156 = vpop.f32.mrb[0].mxu0
    %v1157 = vadd.f32 %v1108, %v1156
    %v1158 = vpop.f32.mrb[0].mxu0
    %v1159 = vpop.f32.mrb[0].mxu0
    %v1160 = vadd.f32 %v1111, %v1159
    %v1161 = vpop.f32.mrb[0].mxu0
    %1162 = vmatprep.mubr.bf16.mxu0 %v816
    %1163 = vmatmul.mubr.bf16.gmra.mrb[0].mxu0 %v815
    %v1164 = vpop.f32.mrb[0].mxu0
    %v1165 = vadd.f32 %v1116, %v1164
    %v1166 = vpop.f32.mrb[0].mxu0
    %v1167 = vpop.f32.mrb[0].mxu0
    %v1168 = vadd.f32 %v1119, %v1167
    %v1169 = vpop.f32.mrb[0].mxu0
    %1170 = vdwg.mxu0
    %v1171 = vadd.f32 %v805, %v1157
    %v1172 = vadd.f32 %v806, %v1160
    %v1173 = vadd.f32 %v807, %v1165
    %v1174 = vadd.f32 %v808, %v1168
    %1175 = vst [vmem:[#allocation2] sm:$0xff] %v1171
    %1176 = vst [vmem:[#allocation2 + $0x8] sm:$0xff] %v1172
    %1177 = vst [vmem:[#allocation2 + $0x10] sm:$0xff] %v1173
    %1178 = vst [vmem:[#allocation2 + $0x18] sm:$0xff] %v1174
    // Predicated region
    $region30: #{tpu_custom_call.1} parent=1 // pred_check
      %p1179 = pneg %p57
    $region31: #{tpu_custom_call.1} parent=1 // pred_check_branch
      %1181 = sbr.rel (%p1179) target = $region33
    $region32: #{tpu_custom_call.1} parent=1 // pred_region
      %v1182 = vld [vmem:[#allocation2] sm:$0xff]
      %v1183 = vld [vmem:[#allocation2 + $0x8] sm:$0xff]
      %v1184 = vld [vmem:[#allocation2 + $0x10] sm:$0xff]
      %v1185 = vld [vmem:[#allocation2 + $0x18] sm:$0xff]
      %1186 = vst [vmem:[#allocation9] sm:$0xff] %v1182
      %1187 = vst [vmem:[#allocation9 + $0x8] sm:$0xff] %v1183
      %1188 = vst [vmem:[#allocation9 + $0x10] sm:$0xff] %v1184
      %1189 = vst [vmem:[#allocation9 + $0x18] sm:$0xff] %v1185
    $region33: #{tpu_custom_call.1} parent=1 // pred_fallthru
      _
    // Predicated region
    $region34: #{tpu_custom_call.1} parent=1 // pred_check
      _
    $region35: #{tpu_custom_call.1} parent=1 // pred_check_branch
      %1191 = sbr.rel (0) target = $region37
    $region36: #{tpu_custom_call.1} parent=1 // pred_region
      %s1193 = ssub.s32 512, 512
      %1194 = vsyncadd [#allocation5], %s1193
      %s1195 = sshll.u32 [#allocation9], 4
      %s1196 = int_to_ptr.vmem [resolvable:$true] %s1195
      %1201 = dma.vmem_to_hbm [thread:$0]  %s1196, 512, %s3, [#allocation5], 128, 128, 8
    $region37: #{tpu_custom_call.1} parent=1 // pred_fallthru
      _
    // Predicated region
    $region38: #{tpu_custom_call.1} parent=1 // pred_check
      _
    $region39: #{tpu_custom_call.1} parent=1 // pred_check_branch
      %1203 = sbr.rel (0) target = $region41
    $region40: #{tpu_custom_call.1} parent=1 // pred_region
      %1204 = dma.done [#allocation5], 512
    $region41: #{tpu_custom_call.1} parent=1 // pred_fallthru
      _
    %1205 = vsyncpa [#allocation4], 1
    %1206 = vsyncpa [#allocation7], 1
    %1207 = vsyncpa [#allocation5], 1

</llo_original>
